<compile_context>
chip_gen: v5e
topology: v5e:2x2
jax: 0.10.0
libtpu: 0.0.40
codegen_flags: <defaults>
</compile_context>

<pallas_src>
import jax
import jax.numpy as jnp
from jax.experimental import pallas as pl
from jax.experimental.pallas import tpu as pltpu

PHI_H = 128        # phi hidden / output width
FWD_H = 256        # fwd hidden width
DEFAULT_TILE_B = 256


def _round_up(x, m):
    return ((x + m - 1) // m) * m


def icm_kernel(sp_ref, sn_ref, act_ref,
               pw1_ref, pb1_ref, pw2_ref, pb2_ref,
               fw1p_ref, fw1a_ref, fb1_ref, fw2_ref, fb2_ref,
               out_ref):
    """One batch tile of the ICM forward (weights VMEM-resident)."""
    tb = sp_ref.shape[0]

    # ---- phi on stacked [prev; next] rows: one weight push per layer. ----
    x = jnp.concatenate([sp_ref[...], sn_ref[...]], axis=0)        # (2*tb, S)
    cdt = x.dtype                                                  # MXU input dtype

    h = jnp.dot(x, pw1_ref[...], preferred_element_type=jnp.float32) + pb1_ref[...]
    h = jnp.maximum(h, 0.0).astype(cdt)                            # f32 ReLU, cast for MXU
    phi_all = jnp.dot(h, pw2_ref[...], preferred_element_type=jnp.float32) + pb2_ref[...]
    phi_prev = phi_all[:tb]        # torch .detach(): forward-identical
    phi_next = phi_all[tb:]

    # ---- fwd head: concat([phi_prev, action], 1) via split weight matmuls. ----
    h2 = (jnp.dot(phi_prev.astype(cdt), fw1p_ref[...], preferred_element_type=jnp.float32)
          + jnp.dot(act_ref[...], fw1a_ref[...], preferred_element_type=jnp.float32)
          + fb1_ref[...])
    h2 = jnp.maximum(h2, 0.0).astype(cdt)
    pred = jnp.dot(h2, fw2_ref[...], preferred_element_type=jnp.float32) + fb2_ref[...]

    # ---- per-row MSE, written lane-dense as a [1, tb] row slab. ----
    diff = pred - phi_next                                         # f32 elementwise
    mse = jnp.mean(diff * diff, axis=1)                            # (tb,)
    out_ref[...] = mse.reshape(1, tb)


def icm_forward(state_prev, state_next, action_onehot, params,
                *, compute_dtype=jnp.float32, tile_b=DEFAULT_TILE_B):
    B, S = state_prev.shape
    A = action_onehot.shape[1]

    # Tile selection: batch tile multiple of 8 (sublanes); the lane-dense output
    # block must be a multiple of 128 unless it spans the whole padded batch.
    max_tile = max(128, _round_up(int(tile_b), 128))
    b8 = _round_up(B, 8)
    tb = b8 if b8 <= max_tile else max_tile
    B_pad = _round_up(B, tb)
    n_tiles = B_pad // tb

    cdt = jnp.dtype(compute_dtype)

    def pad_rows(x):
        return jnp.pad(x, ((0, B_pad - B), (0, 0)))

    sp = pad_rows(state_prev).astype(cdt)
    sn = pad_rows(state_next).astype(cdt)
    act = pad_rows(action_onehot).astype(cdt)

    # Weights in compute dtype (bf16 on v6e/v7x), biases kept f32 and added
    # after the f32 accumulate (f32 elementwise everywhere -> v5e friendly).
    args = (
        sp, sn, act,
        params["pw1"].astype(cdt), params["pb1"].astype(jnp.float32),
        params["pw2"].astype(cdt), params["pb2"].astype(jnp.float32),
        params["fw1_phi"].astype(cdt), params["fw1_act"].astype(cdt),
        params["fb1"].astype(jnp.float32),
        params["fw2"].astype(cdt), params["fb2"].astype(jnp.float32),
    )

    def batch_spec(d):
        return pl.BlockSpec((tb, d), lambda i: (i, 0))

    def const_spec(shape):
        return pl.BlockSpec(shape, lambda i: (0, 0))   # resident, not re-DMA'd

    in_specs = [batch_spec(S), batch_spec(S), batch_spec(A)] + \
               [const_spec(a.shape) for a in args[3:]]

    out = pl.pallas_call(
        icm_kernel,
        grid=(n_tiles,),
        out_shape=jax.ShapeDtypeStruct((1, B_pad), jnp.float32),
        in_specs=in_specs,
        out_specs=pl.BlockSpec((1, tb), lambda i: (0, i)),
        compiler_params=pltpu.CompilerParams(
            dimension_semantics=("parallel",),   # megacore sharding on v7x
        ),
    )(*args)
    return out[0, :B]   # shape [B], matches torch .mean(1)


def init_params(key, state_dim, action_dim):
    """PyTorch-style uniform(-1/sqrt(fan_in), 1/sqrt(fan_in)) init (f32 master)."""
    def linear(key, fan_in, fan_out):
        kw, kb = jax.random.split(key)
        lim = 1.0 / jnp.sqrt(fan_in)
        w = jax.random.uniform(kw, (fan_in, fan_out), jnp.float32, -lim, lim)
        b = jax.random.uniform(kb, (1, fan_out), jnp.float32, -lim, lim)
        return w, b

    k1, k2, k3, k4 = jax.random.split(key, 4)
    pw1, pb1 = linear(k1, state_dim, PHI_H)
    pw2, pb2 = linear(k2, PHI_H, PHI_H)
    fw1, fb1 = linear(k3, action_dim + PHI_H, FWD_H)
    fw2, fb2 = linear(k4, FWD_H, PHI_H)
    # torch concat order is [phi_prev, action_onehot] -> first 128 rows are phi.
    return {
        "pw1": pw1, "pb1": pb1, "pw2": pw2, "pb2": pb2,
        "fw1_phi": fw1[:PHI_H], "fw1_act": fw1[PHI_H:], "fb1": fb1,
        "fw2": fw2, "fb2": fb2,
    }


def icm_reference(state_prev, state_next, action_onehot, params):
    """Plain-JAX reference of the PyTorch forward, for correctness checks."""
    def phi(x):
        h = jnp.maximum(x @ params["pw1"] + params["pb1"], 0.0)
        return h @ params["pw2"] + params["pb2"]

    phi_prev = phi(state_prev)
    phi_next = phi(state_next)
    cat = jnp.concatenate([phi_prev, action_onehot], axis=1)
    fw1 = jnp.concatenate([params["fw1_phi"], params["fw1_act"]], axis=0)
    h = jnp.maximum(cat @ fw1 + params["fb1"], 0.0)
    pred = h @ params["fw2"] + params["fb2"]
    return jnp.mean((pred - phi_next) ** 2, axis=1)


if __name__ == "__main__":
    B, STATE_DIM, ACTION_DIM = 8, 32, 4

    key = jax.random.PRNGKey(0)
    kp, ks1, ks2, ka = jax.random.split(key, 4)

    params = init_params(kp, STATE_DIM, ACTION_DIM)
    state_prev = jax.random.normal(ks1, (B, STATE_DIM), jnp.float32)
    state_next = jax.random.normal(ks2, (B, STATE_DIM), jnp.float32)
    action_idx = jax.random.randint(ka, (B,), 0, ACTION_DIM)
    action_onehot = jax.nn.one_hot(action_idx, ACTION_DIM, dtype=jnp.float32)

    ref = icm_reference(state_prev, state_next, action_onehot, params)

    # 1) f32 path, single tile.
    out = jax.block_until_ready(
        icm_forward(state_prev, state_next, action_onehot, params))
    assert out.shape == (B,)
    assert jnp.allclose(out, ref, rtol=1e-5, atol=1e-5), (out, ref)

    # 2) bf16 MXU-input path (f32 accumulate / elementwise), loose tolerance.
    out_bf16 = jax.block_until_ready(
        icm_forward(state_prev, state_next, action_onehot, params,
                    compute_dtype=jnp.bfloat16))
    assert out_bf16.shape == (B,)
    assert jnp.allclose(out_bf16, ref, rtol=1e-1, atol=1e-2), (out_bf16, ref)

    # 3) multi-tile pipelined grid with batch padding (B=200 -> 2 tiles of 128).
    k1, k2, k3 = jax.random.split(jax.random.PRNGKey(1), 3)
    B2 = 200
    sp2 = jax.random.normal(k1, (B2, STATE_DIM), jnp.float32)
    sn2 = jax.random.normal(k2, (B2, STATE_DIM), jnp.float32)
    a2 = jax.nn.one_hot(jax.random.randint(k3, (B2,), 0, ACTION_DIM),
                        ACTION_DIM, dtype=jnp.float32)
    out2 = jax.block_until_ready(icm_forward(sp2, sn2, a2, params, tile_b=128))
    ref2 = icm_reference(sp2, sn2, a2, params)
    assert out2.shape == (B2,)
    assert jnp.allclose(out2, ref2, rtol=1e-5, atol=1e-5), (out2, ref2)

    print("KERNEL_OK")
</pallas_src>

<mosaic_0001>
module attributes {stable_mosaic.version = 11 : i64} {
  func.func @icm_kernel(%arg0: i32, %arg1: memref<8x32xf32, #tpu.memory_space<vmem>>, %arg2: memref<8x32xf32, #tpu.memory_space<vmem>>, %arg3: memref<8x4xf32, #tpu.memory_space<vmem>>, %arg4: memref<32x128xf32, #tpu.memory_space<vmem>>, %arg5: memref<1x128xf32, #tpu.memory_space<vmem>>, %arg6: memref<128x128xf32, #tpu.memory_space<vmem>>, %arg7: memref<1x128xf32, #tpu.memory_space<vmem>>, %arg8: memref<128x256xf32, #tpu.memory_space<vmem>>, %arg9: memref<4x256xf32, #tpu.memory_space<vmem>>, %arg10: memref<1x256xf32, #tpu.memory_space<vmem>>, %arg11: memref<256x128xf32, #tpu.memory_space<vmem>>, %arg12: memref<1x128xf32, #tpu.memory_space<vmem>>, %arg13: memref<1x8xf32, #tpu.memory_space<vmem>>) attributes {dimension_semantics = [#tpu.dimension_semantics<parallel>], iteration_bounds = array<i64: 1>, scalar_prefetch = 0 : i64, scratch_operands = 0 : i64, tpu.core_type = #tpu.core_type<tc>, window_params = [{transform_indices = @transform_0, window_bounds = array<i64: 8, 32>}, {transform_indices = @transform_1, window_bounds = array<i64: 8, 32>}, {transform_indices = @transform_2, window_bounds = array<i64: 8, 4>}, {pipeline_mode = #tpu.pipeline_mode<synchronous>, transform_indices = @transform_3, window_bounds = array<i64: 32, 128>}, {pipeline_mode = #tpu.pipeline_mode<synchronous>, transform_indices = @transform_4, window_bounds = array<i64: 1, 128>}, {pipeline_mode = #tpu.pipeline_mode<synchronous>, transform_indices = @transform_5, window_bounds = array<i64: 128, 128>}, {pipeline_mode = #tpu.pipeline_mode<synchronous>, transform_indices = @transform_6, window_bounds = array<i64: 1, 128>}, {pipeline_mode = #tpu.pipeline_mode<synchronous>, transform_indices = @transform_7, window_bounds = array<i64: 128, 256>}, {pipeline_mode = #tpu.pipeline_mode<synchronous>, transform_indices = @transform_8, window_bounds = array<i64: 4, 256>}, {pipeline_mode = #tpu.pipeline_mode<synchronous>, transform_indices = @transform_9, window_bounds = array<i64: 1, 256>}, {pipeline_mode = #tpu.pipeline_mode<synchronous>, transform_indices = @transform_10, window_bounds = array<i64: 256, 128>}, {pipeline_mode = #tpu.pipeline_mode<synchronous>, transform_indices = @transform_11, window_bounds = array<i64: 1, 128>}, {transform_indices = @transform_12, window_bounds = array<i64: 1, 8>}]} {
    %c0 = arith.constant 0 : index
    %c0_0 = arith.constant 0 : index
    %0 = vector.load %arg1[%c0, %c0_0] : memref<8x32xf32, #tpu.memory_space<vmem>>, vector<8x32xf32>
    %c0_1 = arith.constant 0 : index
    %c0_2 = arith.constant 0 : index
    %1 = vector.load %arg2[%c0_1, %c0_2] : memref<8x32xf32, #tpu.memory_space<vmem>>, vector<8x32xf32>
    %2 = tpu.concatenate %0, %1 in 0 : vector<8x32xf32>, vector<8x32xf32> -> vector<16x32xf32>
    %c0_3 = arith.constant 0 : index
    %c0_4 = arith.constant 0 : index
    %3 = vector.load %arg4[%c0_3, %c0_4] : memref<32x128xf32, #tpu.memory_space<vmem>>, vector<32x128xf32>
    %cst = arith.constant dense<0.000000e+00> : vector<16x128xf32>
    %4 = tpu.matmul %2, %3, %cst {dimension_numbers = #tpu.dot_dimension_numbers<[1], [0], [0], [1], [0, 0, 1, 1], [], []>} : vector<16x32xf32>, vector<32x128xf32>, vector<16x128xf32> -> vector<16x128xf32>
    %c0_5 = arith.constant 0 : index
    %c0_6 = arith.constant 0 : index
    %5 = vector.load %arg5[%c0_5, %c0_6] : memref<1x128xf32, #tpu.memory_space<vmem>>, vector<1x128xf32>
    %6 = vector.broadcast %5 : vector<1x128xf32> to vector<16x128xf32>
    %7 = arith.addf %4, %6 : vector<16x128xf32>
    %cst_7 = arith.constant 0.000000e+00 : f32
    %8 = vector.broadcast %cst_7 : f32 to vector<16x128xf32>
    %9 = arith.maximumf %7, %8 : vector<16x128xf32>
    %c0_8 = arith.constant 0 : index
    %c0_9 = arith.constant 0 : index
    %10 = vector.load %arg6[%c0_8, %c0_9] : memref<128x128xf32, #tpu.memory_space<vmem>>, vector<128x128xf32>
    %cst_10 = arith.constant dense<0.000000e+00> : vector<16x128xf32>
    %11 = tpu.matmul %9, %10, %cst_10 {dimension_numbers = #tpu.dot_dimension_numbers<[1], [0], [0], [1], [0, 0, 1, 1], [], []>} : vector<16x128xf32>, vector<128x128xf32>, vector<16x128xf32> -> vector<16x128xf32>
    %c0_11 = arith.constant 0 : index
    %c0_12 = arith.constant 0 : index
    %12 = vector.load %arg7[%c0_11, %c0_12] : memref<1x128xf32, #tpu.memory_space<vmem>>, vector<1x128xf32>
    %13 = vector.broadcast %12 : vector<1x128xf32> to vector<16x128xf32>
    %14 = arith.addf %11, %13 : vector<16x128xf32>
    %15 = vector.extract_strided_slice %14 {offsets = [0, 0], sizes = [8, 128], strides = [1, 1]} : vector<16x128xf32> to vector<8x128xf32>
    %16 = vector.extract_strided_slice %14 {offsets = [8, 0], sizes = [8, 128], strides = [1, 1]} : vector<16x128xf32> to vector<8x128xf32>
    %c0_13 = arith.constant 0 : index
    %c0_14 = arith.constant 0 : index
    %17 = vector.load %arg8[%c0_13, %c0_14] : memref<128x256xf32, #tpu.memory_space<vmem>>, vector<128x256xf32>
    %cst_15 = arith.constant dense<0.000000e+00> : vector<8x256xf32>
    %18 = tpu.matmul %15, %17, %cst_15 {dimension_numbers = #tpu.dot_dimension_numbers<[1], [0], [0], [1], [0, 0, 1, 1], [], []>} : vector<8x128xf32>, vector<128x256xf32>, vector<8x256xf32> -> vector<8x256xf32>
    %c0_16 = arith.constant 0 : index
    %c0_17 = arith.constant 0 : index
    %19 = vector.load %arg3[%c0_16, %c0_17] : memref<8x4xf32, #tpu.memory_space<vmem>>, vector<8x4xf32>
    %c0_18 = arith.constant 0 : index
    %c0_19 = arith.constant 0 : index
    %20 = vector.load %arg9[%c0_18, %c0_19] : memref<4x256xf32, #tpu.memory_space<vmem>>, vector<4x256xf32>
    %cst_20 = arith.constant dense<0.000000e+00> : vector<8x256xf32>
    %21 = tpu.matmul %19, %20, %cst_20 {dimension_numbers = #tpu.dot_dimension_numbers<[1], [0], [0], [1], [0, 0, 1, 1], [], []>} : vector<8x4xf32>, vector<4x256xf32>, vector<8x256xf32> -> vector<8x256xf32>
    %22 = arith.addf %18, %21 : vector<8x256xf32>
    %c0_21 = arith.constant 0 : index
    %c0_22 = arith.constant 0 : index
    %23 = vector.load %arg10[%c0_21, %c0_22] : memref<1x256xf32, #tpu.memory_space<vmem>>, vector<1x256xf32>
    %24 = vector.broadcast %23 : vector<1x256xf32> to vector<8x256xf32>
    %25 = arith.addf %22, %24 : vector<8x256xf32>
    %cst_23 = arith.constant 0.000000e+00 : f32
    %26 = vector.broadcast %cst_23 : f32 to vector<8x256xf32>
    %27 = arith.maximumf %25, %26 : vector<8x256xf32>
    %c0_24 = arith.constant 0 : index
    %c0_25 = arith.constant 0 : index
    %28 = vector.load %arg11[%c0_24, %c0_25] : memref<256x128xf32, #tpu.memory_space<vmem>>, vector<256x128xf32>
    %cst_26 = arith.constant dense<0.000000e+00> : vector<8x128xf32>
    %29 = tpu.matmul %27, %28, %cst_26 {dimension_numbers = #tpu.dot_dimension_numbers<[1], [0], [0], [1], [0, 0, 1, 1], [], []>} : vector<8x256xf32>, vector<256x128xf32>, vector<8x128xf32> -> vector<8x128xf32>
    %c0_27 = arith.constant 0 : index
    %c0_28 = arith.constant 0 : index
    %30 = vector.load %arg12[%c0_27, %c0_28] : memref<1x128xf32, #tpu.memory_space<vmem>>, vector<1x128xf32>
    %31 = vector.broadcast %30 : vector<1x128xf32> to vector<8x128xf32>
    %32 = arith.addf %29, %31 : vector<8x128xf32>
    %33 = arith.subf %32, %16 : vector<8x128xf32>
    %34 = arith.mulf %33, %33 : vector<8x128xf32>
    %cst_29 = arith.constant dense<0.000000e+00> : vector<8xf32>
    %35 = vector.multi_reduction <add>, %34, %cst_29 [1] : vector<8x128xf32> to vector<8xf32>
    %cst_30 = arith.constant 1.280000e+02 : f32
    %36 = vector.broadcast %cst_30 : f32 to vector<8xf32>
    %37 = arith.divf %35, %36 : vector<8xf32>
    %38 = vector.shape_cast %37 : vector<8xf32> to vector<1x8xf32>
    %c0_31 = arith.constant 0 : index
    %c0_32 = arith.constant 0 : index
    %39 = vector.load %arg13[%c0_31, %c0_32] : memref<1x8xf32, #tpu.memory_space<vmem>>, vector<1x8xf32>
    tpu.vector_store %arg13[%c0_31, %c0_32], %38 {strides = array<i32>} : memref<1x8xf32, #tpu.memory_space<vmem>>, vector<1x8xf32>,
    return
  }
  func.func @transform_0(%arg0: i32) -> (i32, i32) {
    %c0_i32 = arith.constant 0 : i32
    %c0_i32_0 = arith.constant 0 : i32
    return %arg0, %c0_i32 : i32, i32
  }
  func.func @transform_1(%arg0: i32) -> (i32, i32) {
    %c0_i32 = arith.constant 0 : i32
    %c0_i32_0 = arith.constant 0 : i32
    return %arg0, %c0_i32 : i32, i32
  }
  func.func @transform_2(%arg0: i32) -> (i32, i32) {
    %c0_i32 = arith.constant 0 : i32
    %c0_i32_0 = arith.constant 0 : i32
    return %arg0, %c0_i32 : i32, i32
  }
  func.func @transform_3(%arg0: i32) -> (i32, i32) {
    %c0_i32 = arith.constant 0 : i32
    %c0_i32_0 = arith.constant 0 : i32
    %c0_i32_1 = arith.constant 0 : i32
    return %c0_i32, %c0_i32_0 : i32, i32
  }
  func.func @transform_4(%arg0: i32) -> (i32, i32) {
    %c0_i32 = arith.constant 0 : i32
    %c0_i32_0 = arith.constant 0 : i32
    %c0_i32_1 = arith.constant 0 : i32
    return %c0_i32, %c0_i32_0 : i32, i32
  }
  func.func @transform_5(%arg0: i32) -> (i32, i32) {
    %c0_i32 = arith.constant 0 : i32
    %c0_i32_0 = arith.constant 0 : i32
    %c0_i32_1 = arith.constant 0 : i32
    return %c0_i32, %c0_i32_0 : i32, i32
  }
  func.func @transform_6(%arg0: i32) -> (i32, i32) {
    %c0_i32 = arith.constant 0 : i32
    %c0_i32_0 = arith.constant 0 : i32
    %c0_i32_1 = arith.constant 0 : i32
    return %c0_i32, %c0_i32_0 : i32, i32
  }
  func.func @transform_7(%arg0: i32) -> (i32, i32) {
    %c0_i32 = arith.constant 0 : i32
    %c0_i32_0 = arith.constant 0 : i32
    %c0_i32_1 = arith.constant 0 : i32
    return %c0_i32, %c0_i32_0 : i32, i32
  }
  func.func @transform_8(%arg0: i32) -> (i32, i32) {
    %c0_i32 = arith.constant 0 : i32
    %c0_i32_0 = arith.constant 0 : i32
    %c0_i32_1 = arith.constant 0 : i32
    return %c0_i32, %c0_i32_0 : i32, i32
  }
  func.func @transform_9(%arg0: i32) -> (i32, i32) {
    %c0_i32 = arith.constant 0 : i32
    %c0_i32_0 = arith.constant 0 : i32
    %c0_i32_1 = arith.constant 0 : i32
    return %c0_i32, %c0_i32_0 : i32, i32
  }
  func.func @transform_10(%arg0: i32) -> (i32, i32) {
    %c0_i32 = arith.constant 0 : i32
    %c0_i32_0 = arith.constant 0 : i32
    %c0_i32_1 = arith.constant 0 : i32
    return %c0_i32, %c0_i32_0 : i32, i32
  }
  func.func @transform_11(%arg0: i32) -> (i32, i32) {
    %c0_i32 = arith.constant 0 : i32
    %c0_i32_0 = arith.constant 0 : i32
    %c0_i32_1 = arith.constant 0 : i32
    return %c0_i32, %c0_i32_0 : i32, i32
  }
  func.func @transform_12(%arg0: i32) -> (i32, i32) {
    %c0_i32 = arith.constant 0 : i32
    %c0_i32_0 = arith.constant 0 : i32
    return %c0_i32, %arg0 : i32, i32
  }
}

</mosaic_0001>

<llo_original>
// kernel: tpu_custom_call.1
$region0: #{tpu_custom_call.1}
  #allocation0 [shape = 'u32[]', space=smem, size = 0x4, offset = 0x4, fixed_abs, tag = 'smem constant byte address 0x4 - core index']
  #allocation1 [shape = 'u32[72,128]{1,0:T(1,128)}', space=vmem, size = 0x9000, scoped, tag = 'internal scratch']
  %s0 = inlined_call_operand.vmem [shape: f32[8,32], index: 0, kind: input, shape index: {}]
  %s1 = inlined_call_operand.hbm [shape: f32[8,32], index: 1, kind: input, shape index: {}]
  %s2 = inlined_call_operand.vmem [shape: f32[8,4], index: 2, kind: input, shape index: {}]
  %s3 = inlined_call_operand.hbm [shape: f32[32,128], index: 3, kind: input, shape index: {}]
  %s4 = inlined_call_operand.hbm [shape: f32[1,128], index: 4, kind: input, shape index: {}]
  %s5 = inlined_call_operand.hbm [shape: f32[128,128], index: 5, kind: input, shape index: {}]
  %s6 = inlined_call_operand.hbm [shape: f32[1,128], index: 6, kind: input, shape index: {}]
  %s7 = inlined_call_operand.hbm [shape: f32[128,256], index: 7, kind: input, shape index: {}]
  %s8 = inlined_call_operand.vmem [shape: f32[4,256], index: 8, kind: input, shape index: {}]
  %s9 = inlined_call_operand.vmem [shape: f32[1,256], index: 9, kind: input, shape index: {}]
  %s10 = inlined_call_operand.hbm [shape: f32[256,128], index: 10, kind: input, shape index: {}]
  %s11 = inlined_call_operand.vmem [shape: f32[1,128], index: 11, kind: input, shape index: {}]
  %s12 = inlined_call_operand.hbm [shape: f32[1,8], index: 12, kind: output, shape index: {}]
  %s13 = sld [smem:[#allocation0]]
  $region86: #{tpu_custom_call.1} parent=0
    _
  %s15 = ssub.s32 1, %s13
  %s16 = scalar_select 0, %s15, %s13
  $region1: #{tpu_custom_call.1} parent=0
    #allocation2 [shape = 'u8[4096]{0}', space=vmem, size = 0x1000, scoped, tag = 'input window, operand 1, single buffered']
    #allocation3 [shape = 's32[1]{0}', space=sflag, size = 0x4, scoped, tag = 'scoped memory for tpu_custom_call.1']
    #allocation4 [shape = 's32[1]{0}', space=sflag, size = 0x4, scoped, tag = 'scoped memory for tpu_custom_call.1']
    #allocation5 [shape = 'u8[16384]{0}', space=vmem, size = 0x4000, scoped, tag = 'input window, operand 3, single buffered']
    #allocation6 [shape = 's32[1]{0}', space=sflag, size = 0x4, scoped, tag = 'scoped memory for tpu_custom_call.1']
    #allocation7 [shape = 'u8[512]{0}', space=vmem, size = 0x400, scoped, tag = 'input window, operand 4, single buffered']
    #allocation8 [shape = 'u8[65536]{0}', space=vmem, size = 0x10000, scoped, tag = 'input window, operand 5, single buffered']
    #allocation9 [shape = 's32[1]{0}', space=sflag, size = 0x4, scoped, tag = 'scoped memory for tpu_custom_call.1']
    #allocation10 [shape = 'u8[512]{0}', space=vmem, size = 0x400, scoped, tag = 'input window, operand 6, single buffered']
    #allocation11 [shape = 'u8[131072]{0}', space=vmem, size = 0x20000, scoped, tag = 'input window, operand 7, single buffered']
    #allocation12 [shape = 's32[1]{0}', space=sflag, size = 0x4, scoped, tag = 'scoped memory for tpu_custom_call.1']
    #allocation13 [shape = 'u8[131072]{0}', space=vmem, size = 0x20000, scoped, tag = 'input window, operand 10, single buffered']
    #allocation14 [shape = 'u8[512]{0}', space=vmem, size = 0x400, scoped, tag = 'output window, operand 0, single buffered']
    %17 = vsyncpa [#allocation3], 0
    %18 = vsyncpa [#allocation6], 0
    %19 = vsyncpa [#allocation9], 0
    %20 = vsyncpa [#allocation12], 0
    %21 = vsyncpa [#allocation4], 0
    // Predicated region
    $region2: #{tpu_custom_call.1} parent=1 // pred_check
      _
    $region3: #{tpu_custom_call.1} parent=1 // pred_check_branch
      %23 = sbr.rel (0) target = $region5
    $region4: #{tpu_custom_call.1} parent=1 // pred_region
      _
    $region5: #{tpu_custom_call.1} parent=1 // pred_fallthru
      _
    // Predicated region
    $region6: #{tpu_custom_call.1} parent=1 // pred_check
      _
    $region7: #{tpu_custom_call.1} parent=1 // pred_check_branch
      %25 = sbr.rel (0) target = $region9
    $region8: #{tpu_custom_call.1} parent=1 // pred_region
      %27 = vsyncadd [#allocation3], 0
      %s29 = sshll.u32 %s1, 4
      %s30 = int_to_ptr.hbm [resolvable:$true] %s29
      %s31 = sshll.u32 [#allocation2], 4
      %s32 = int_to_ptr.vmem [resolvable:$true] %s31
      %34 = dma.hbm_to_vmem [thread:$0]  %s30, 128, %s32, [#allocation3]
    $region9: #{tpu_custom_call.1} parent=1 // pred_fallthru
      _
    // Predicated region
    $region10: #{tpu_custom_call.1} parent=1 // pred_check
      _
    $region11: #{tpu_custom_call.1} parent=1 // pred_check_branch
      %36 = sbr.rel (0) target = $region13
    $region12: #{tpu_custom_call.1} parent=1 // pred_region
      _
    $region13: #{tpu_custom_call.1} parent=1 // pred_fallthru
      _
    // Predicated region
    $region14: #{tpu_custom_call.1} parent=1 // pred_check
      _
    $region15: #{tpu_custom_call.1} parent=1 // pred_check_branch
      %38 = sbr.rel (0) target = $region17
    $region16: #{tpu_custom_call.1} parent=1 // pred_region
      %40 = vsyncadd [#allocation6], 0
      %s41 = sshll.u32 %s3, 4
      %s42 = int_to_ptr.hbm [resolvable:$true] %s41
      %s43 = sshll.u32 [#allocation5], 4
      %s44 = int_to_ptr.vmem [resolvable:$true] %s43
      %49 = dma.hbm_to_vmem [thread:$0]  %s42, 512, %s44, [#allocation6], 128, 128, 8
    $region17: #{tpu_custom_call.1} parent=1 // pred_fallthru
      _
    // Predicated region
    $region18: #{tpu_custom_call.1} parent=1 // pred_check
      _
    $region19: #{tpu_custom_call.1} parent=1 // pred_check_branch
      %51 = sbr.rel (0) target = $region21
    $region20: #{tpu_custom_call.1} parent=1 // pred_region
      %53 = vsyncadd [#allocation6], 0
      %s55 = sshll.u32 %s4, 4
      %s56 = int_to_ptr.hbm [resolvable:$true] %s55
      %s57 = sshll.u32 [#allocation7], 4
      %s58 = int_to_ptr.vmem [resolvable:$true] %s57
      %60 = dma.hbm_to_vmem [thread:$0]  %s56, 16, %s58, [#allocation6]
    $region21: #{tpu_custom_call.1} parent=1 // pred_fallthru
      _
    // Predicated region
    $region22: #{tpu_custom_call.1} parent=1 // pred_check
      _
    $region23: #{tpu_custom_call.1} parent=1 // pred_check_branch
      %62 = sbr.rel (0) target = $region25
    $region24: #{tpu_custom_call.1} parent=1 // pred_region
      %64 = vsyncadd [#allocation9], 0
      %s65 = sshll.u32 %s5, 4
      %s66 = int_to_ptr.hbm [resolvable:$true] %s65
      %s67 = sshll.u32 [#allocation8], 4
      %s68 = int_to_ptr.vmem [resolvable:$true] %s67
      %73 = dma.hbm_to_vmem [thread:$0]  %s66, 2048, %s68, [#allocation9], 128, 128, 8
    $region25: #{tpu_custom_call.1} parent=1 // pred_fallthru
      _
    // Predicated region
    $region26: #{tpu_custom_call.1} parent=1 // pred_check
      _
    $region27: #{tpu_custom_call.1} parent=1 // pred_check_branch
      %75 = sbr.rel (0) target = $region29
    $region28: #{tpu_custom_call.1} parent=1 // pred_region
      %77 = vsyncadd [#allocation9], 0
      %s79 = sshll.u32 %s6, 4
      %s80 = int_to_ptr.hbm [resolvable:$true] %s79
      %s81 = sshll.u32 [#allocation10], 4
      %s82 = int_to_ptr.vmem [resolvable:$true] %s81
      %84 = dma.hbm_to_vmem [thread:$0]  %s80, 16, %s82, [#allocation9]
    $region29: #{tpu_custom_call.1} parent=1 // pred_fallthru
      _
    // Predicated region
    $region30: #{tpu_custom_call.1} parent=1 // pred_check
      _
    $region31: #{tpu_custom_call.1} parent=1 // pred_check_branch
      %86 = sbr.rel (0) target = $region33
    $region32: #{tpu_custom_call.1} parent=1 // pred_region
      %88 = vsyncadd [#allocation12], 0
      %s89 = sshll.u32 %s7, 4
      %s90 = int_to_ptr.hbm [resolvable:$true] %s89
      %s91 = sshll.u32 [#allocation11], 4
      %s92 = int_to_ptr.vmem [resolvable:$true] %s91
      %97 = dma.hbm_to_vmem [thread:$0]  %s90, 4096, %s92, [#allocation12], 256, 256, 16
    $region33: #{tpu_custom_call.1} parent=1 // pred_fallthru
      _
    // Predicated region
    $region34: #{tpu_custom_call.1} parent=1 // pred_check
      _
    $region35: #{tpu_custom_call.1} parent=1 // pred_check_branch
      %99 = sbr.rel (0) target = $region37
    $region36: #{tpu_custom_call.1} parent=1 // pred_region
      _
    $region37: #{tpu_custom_call.1} parent=1 // pred_fallthru
      _
    // Predicated region
    $region38: #{tpu_custom_call.1} parent=1 // pred_check
      _
    $region39: #{tpu_custom_call.1} parent=1 // pred_check_branch
      %101 = sbr.rel (0) target = $region41
    $region40: #{tpu_custom_call.1} parent=1 // pred_region
      _
    $region41: #{tpu_custom_call.1} parent=1 // pred_fallthru
      _
    // Predicated region
    $region42: #{tpu_custom_call.1} parent=1 // pred_check
      _
    $region43: #{tpu_custom_call.1} parent=1 // pred_check_branch
      %103 = sbr.rel (0) target = $region45
    $region44: #{tpu_custom_call.1} parent=1 // pred_region
      %105 = vsyncadd [#allocation12], 0
      %s106 = sshll.u32 %s10, 4
      %s107 = int_to_ptr.hbm [resolvable:$true] %s106
      %s108 = sshll.u32 [#allocation13], 4
      %s109 = int_to_ptr.vmem [resolvable:$true] %s108
      %114 = dma.hbm_to_vmem [thread:$0]  %s107, 4096, %s109, [#allocation12], 128, 128, 8
    $region45: #{tpu_custom_call.1} parent=1 // pred_fallthru
      _
    // Predicated region
    $region46: #{tpu_custom_call.1} parent=1 // pred_check
      _
    $region47: #{tpu_custom_call.1} parent=1 // pred_check_branch
      %116 = sbr.rel (0) target = $region49
    $region48: #{tpu_custom_call.1} parent=1 // pred_region
      _
    $region49: #{tpu_custom_call.1} parent=1 // pred_fallthru
      _
    // Predicated region
    $region50: #{tpu_custom_call.1} parent=1 // pred_check
      _
    $region51: #{tpu_custom_call.1} parent=1 // pred_check_branch
      %118 = sbr.rel (0) target = $region53
    $region52: #{tpu_custom_call.1} parent=1 // pred_region
      %120 = dma.done [#allocation3], 128
    $region53: #{tpu_custom_call.1} parent=1 // pred_fallthru
      _
    // Predicated region
    $region54: #{tpu_custom_call.1} parent=1 // pred_check
      _
    $region55: #{tpu_custom_call.1} parent=1 // pred_check_branch
      %122 = sbr.rel (0) target = $region57
    $region56: #{tpu_custom_call.1} parent=1 // pred_region
      %124 = dma.done [#allocation6], 512
    $region57: #{tpu_custom_call.1} parent=1 // pred_fallthru
      _
    // Predicated region
    $region58: #{tpu_custom_call.1} parent=1 // pred_check
      _
    $region59: #{tpu_custom_call.1} parent=1 // pred_check_branch
      %126 = sbr.rel (0) target = $region61
    $region60: #{tpu_custom_call.1} parent=1 // pred_region
      %128 = dma.done [#allocation6], 16
    $region61: #{tpu_custom_call.1} parent=1 // pred_fallthru
      _
    // Predicated region
    $region62: #{tpu_custom_call.1} parent=1 // pred_check
      _
    $region63: #{tpu_custom_call.1} parent=1 // pred_check_branch
      %130 = sbr.rel (0) target = $region65
    $region64: #{tpu_custom_call.1} parent=1 // pred_region
      %132 = dma.done [#allocation9], 2048
    $region65: #{tpu_custom_call.1} parent=1 // pred_fallthru
      _
    // Predicated region
    $region66: #{tpu_custom_call.1} parent=1 // pred_check
      _
    $region67: #{tpu_custom_call.1} parent=1 // pred_check_branch
      %134 = sbr.rel (0) target = $region69
    $region68: #{tpu_custom_call.1} parent=1 // pred_region
      %136 = dma.done [#allocation9], 16
    $region69: #{tpu_custom_call.1} parent=1 // pred_fallthru
      _
    // Predicated region
    $region70: #{tpu_custom_call.1} parent=1 // pred_check
      _
    $region71: #{tpu_custom_call.1} parent=1 // pred_check_branch
      %138 = sbr.rel (0) target = $region73
    $region72: #{tpu_custom_call.1} parent=1 // pred_region
      %140 = dma.done [#allocation12], 4096
    $region73: #{tpu_custom_call.1} parent=1 // pred_fallthru
      _
    // Predicated region
    $region74: #{tpu_custom_call.1} parent=1 // pred_check
      _
    $region75: #{tpu_custom_call.1} parent=1 // pred_check_branch
      %142 = sbr.rel (0) target = $region77
    $region76: #{tpu_custom_call.1} parent=1 // pred_region
      %144 = dma.done [#allocation12], 4096
    $region77: #{tpu_custom_call.1} parent=1 // pred_fallthru
      _
    %v145 = vld [vmem:[%s0] sm:$0xff]
    %v146 = vld [vmem:[#allocation2] sm:$0xff]
    %v147 = vld [vmem:[#allocation5] sm:$0xff]
    %v148 = vld [vmem:[#allocation5 + $0x8] sm:$0xff]
    %v149 = vld [vmem:[#allocation5 + $0x10] sm:$0xff]
    %v150 = vld [vmem:[#allocation5 + $0x18] sm:$0xff]
    %v151 = vld [vmem:[#allocation7] sm:$0x1]
    %v153 = vperm.slane %v151, 0
    %vm155 = vcmask 261120
    %v157 = vsel %vm155, %v145, 0
    %v160 = vsel %vm155, %v146, 0
    %162 = vmatpush.msra.mxu0 0.0
    %163 = vmatpush.msra.mxu0 0.0
    %164 = vmatpush.msra.mxu0 0.0
    %165 = vmatpush.msra.mxu0 0.0
    %166 = vmatpush.msra.mxu0 0.0
    %167 = vmatpush.msra.mxu0 0.0
    %168 = vmatpush.msra.mxu0 0.0
    %169 = vmatpush.msra.mxu0 0.0
    %170 = vmatpush.msra.mxu0 0.0
    %171 = vmatpush.msra.mxu0 0.0
    %172 = vmatpush.msra.mxu0 0.0
    %173 = vmatpush.msra.mxu0 0.0
    %174 = vmatpush.msra.mxu0 %v150
    %175 = vmatpush.msra.mxu0 %v149
    %176 = vmatpush.msra.mxu0 %v148
    %177 = vmatpush.msra.mxu0 %v147
    %178 = vmatmul.f32.gmra.mxu0 %v157
    %v179 = vpop.f32.mrf.mxu0
    %v180 = vadd.f32 %v153, %v179
    %181 = vmatmul.f32.gmra.mxu0 %v160
    %v182 = vpop.f32.mrf.mxu0
    %v183 = vadd.f32 %v153, %v182
    %184 = vdwg.mxu0
    %v185 = vmax.f32 %v180, 0.0
    %v186 = vmax.f32 %v183, 0.0
    %v187 = vld [vmem:[#allocation8] sm:$0xff]
    %v188 = vld [vmem:[#allocation8 + $0x8] sm:$0xff]
    %v189 = vld [vmem:[#allocation8 + $0x10] sm:$0xff]
    %v190 = vld [vmem:[#allocation8 + $0x18] sm:$0xff]
    %v191 = vld [vmem:[#allocation8 + $0x20] sm:$0xff]
    %v192 = vld [vmem:[#allocation8 + $0x28] sm:$0xff]
    %v193 = vld [vmem:[#allocation8 + $0x30] sm:$0xff]
    %v194 = vld [vmem:[#allocation8 + $0x38] sm:$0xff]
    %v195 = vld [vmem:[#allocation8 + $0x40] sm:$0xff]
    %v196 = vld [vmem:[#allocation8 + $0x48] sm:$0xff]
    %v197 = vld [vmem:[#allocation8 + $0x50] sm:$0xff]
    %v198 = vld [vmem:[#allocation8 + $0x58] sm:$0xff]
    %v199 = vld [vmem:[#allocation8 + $0x60] sm:$0xff]
    %v200 = vld [vmem:[#allocation8 + $0x68] sm:$0xff]
    %v201 = vld [vmem:[#allocation8 + $0x70] sm:$0xff]
    %v202 = vld [vmem:[#allocation8 + $0x78] sm:$0xff]
    %v203 = vld [vmem:[#allocation10] sm:$0x1]
    %v205 = vperm.slane %v203, 0
    %207 = vmatpush.msra.mxu0 %v202
    %208 = vmatpush.msra.mxu0 %v201
    %209 = vmatpush.msra.mxu0 %v200
    %210 = vmatpush.msra.mxu0 %v199
    %211 = vmatpush.msra.mxu0 %v198
    %212 = vmatpush.msra.mxu0 %v197
    %213 = vmatpush.msra.mxu0 %v196
    %214 = vmatpush.msra.mxu0 %v195
    %215 = vmatpush.msra.mxu0 %v194
    %216 = vmatpush.msra.mxu0 %v193
    %217 = vmatpush.msra.mxu0 %v192
    %218 = vmatpush.msra.mxu0 %v191
    %219 = vmatpush.msra.mxu0 %v190
    %220 = vmatpush.msra.mxu0 %v189
    %221 = vmatpush.msra.mxu0 %v188
    %222 = vmatpush.msra.mxu0 %v187
    %223 = vmatmul.f32.gmra.mxu0 %v185
    %v224 = vpop.f32.mrf.mxu0
    %v225 = vadd.f32 %v205, %v224
    %226 = vmatmul.f32.gmra.mxu0 %v186
    %v227 = vpop.f32.mrf.mxu0
    %v228 = vadd.f32 %v205, %v227
    %229 = vdwg.mxu0
    %v230 = vld [vmem:[#allocation11] sm:$0xff]
    %v231 = vld [vmem:[#allocation11 + $0x8] sm:$0xff]
    %v232 = vld [vmem:[#allocation11 + $0x10] sm:$0xff]
    %v233 = vld [vmem:[#allocation11 + $0x18] sm:$0xff]
    %v234 = vld [vmem:[#allocation11 + $0x20] sm:$0xff]
    %v235 = vld [vmem:[#allocation11 + $0x28] sm:$0xff]
    %v236 = vld [vmem:[#allocation11 + $0x30] sm:$0xff]
    %v237 = vld [vmem:[#allocation11 + $0x38] sm:$0xff]
    %v238 = vld [vmem:[#allocation11 + $0x40] sm:$0xff]
    %v239 = vld [vmem:[#allocation11 + $0x48] sm:$0xff]
    %v240 = vld [vmem:[#allocation11 + $0x50] sm:$0xff]
    %v241 = vld [vmem:[#allocation11 + $0x58] sm:$0xff]
    %v242 = vld [vmem:[#allocation11 + $0x60] sm:$0xff]
    %v243 = vld [vmem:[#allocation11 + $0x68] sm:$0xff]
    %v244 = vld [vmem:[#allocation11 + $0x70] sm:$0xff]
    %v245 = vld [vmem:[#allocation11 + $0x78] sm:$0xff]
    %v246 = vld [vmem:[#allocation11 + $0x80] sm:$0xff]
    %v247 = vld [vmem:[#allocation11 + $0x88] sm:$0xff]
    %v248 = vld [vmem:[#allocation11 + $0x90] sm:$0xff]
    %v249 = vld [vmem:[#allocation11 + $0x98] sm:$0xff]
    %v250 = vld [vmem:[#allocation11 + $0xa0] sm:$0xff]
    %v251 = vld [vmem:[#allocation11 + $0xa8] sm:$0xff]
    %v252 = vld [vmem:[#allocation11 + $0xb0] sm:$0xff]
    %v253 = vld [vmem:[#allocation11 + $0xb8] sm:$0xff]
    %v254 = vld [vmem:[#allocation11 + $0xc0] sm:$0xff]
    %v255 = vld [vmem:[#allocation11 + $0xc8] sm:$0xff]
    %v256 = vld [vmem:[#allocation11 + $0xd0] sm:$0xff]
    %v257 = vld [vmem:[#allocation11 + $0xd8] sm:$0xff]
    %v258 = vld [vmem:[#allocation11 + $0xe0] sm:$0xff]
    %v259 = vld [vmem:[#allocation11 + $0xe8] sm:$0xff]
    %v260 = vld [vmem:[#allocation11 + $0xf0] sm:$0xff]
    %v261 = vld [vmem:[#allocation11 + $0xf8] sm:$0xff]
    %v262 = vld [vmem:[%s2] sm:$0xff]
    %v263 = vld [vmem:[%s8] sm:$0xff]
    %265 = vst [vmem:[#allocation1] ss:$2 sm:$0xff] %v263
    %v266 = vld.sshfl [vmem:[#allocation1] sm:$0xff pattern:$0x75316420]
    %v267 = vld.sshfl [vmem:[#allocation1 + $0x8] sm:$0xff pattern:$0x75316420]
    %vm268 = vcmask 31744
    %v270 = vsel %vm268, %v262, 0
    %vm272 = vcmask 1043456
    %v273 = vsel %vm272, %v266, 0
    %v275 = vsel %vm272, %v267, 0
    %277 = vmatpush.msra.mxu0 0.0
    %278 = vmatpush.msra.mxu0 0.0
    %279 = vmatpush.msra.mxu0 0.0
    %280 = vmatpush.msra.mxu0 0.0
    %281 = vmatpush.msra.mxu0 0.0
    %282 = vmatpush.msra.mxu0 0.0
    %283 = vmatpush.msra.mxu0 0.0
    %284 = vmatpush.msra.mxu0 0.0
    %285 = vmatpush.msra.mxu0 0.0
    %286 = vmatpush.msra.mxu0 0.0
    %287 = vmatpush.msra.mxu0 0.0
    %288 = vmatpush.msra.mxu0 0.0
    %289 = vmatpush.msra.mxu0 0.0
    %290 = vmatpush.msra.mxu0 0.0
    %291 = vmatpush.msra.mxu0 0.0
    %292 = vmatpush.msra.mxu0 %v273
    %293 = vmatmul.f32.gmra.mxu0 %v270
    %v294 = vpop.f32.mrf.mxu0
    %v295 = vadd.f32 0.0, %v294
    %296 = vdwg.mxu0
    %297 = vmatpush.msra.mxu0 0.0
    %298 = vmatpush.msra.mxu0 0.0
    %299 = vmatpush.msra.mxu0 0.0
    %300 = vmatpush.msra.mxu0 0.0
    %301 = vmatpush.msra.mxu0 0.0
    %302 = vmatpush.msra.mxu0 0.0
    %303 = vmatpush.msra.mxu0 0.0
    %304 = vmatpush.msra.mxu0 0.0
    %305 = vmatpush.msra.mxu0 0.0
    %306 = vmatpush.msra.mxu0 0.0
    %307 = vmatpush.msra.mxu0 0.0
    %308 = vmatpush.msra.mxu0 0.0
    %309 = vmatpush.msra.mxu0 0.0
    %310 = vmatpush.msra.mxu0 0.0
    %311 = vmatpush.msra.mxu0 0.0
    %312 = vmatpush.msra.mxu0 %v275
    %313 = vmatmul.f32.gmra.mxu0 %v270
    %v314 = vpop.f32.mrf.mxu0
    %v315 = vadd.f32 0.0, %v314
    %316 = vdwg.mxu0
    %317 = vmatpush.msra.mxu0 %v260
    %318 = vmatpush.msra.mxu0 %v258
    %319 = vmatpush.msra.mxu0 %v256
    %320 = vmatpush.msra.mxu0 %v254
    %321 = vmatpush.msra.mxu0 %v252
    %322 = vmatpush.msra.mxu0 %v250
    %323 = vmatpush.msra.mxu0 %v248
    %324 = vmatpush.msra.mxu0 %v246
    %325 = vmatpush.msra.mxu0 %v244
    %326 = vmatpush.msra.mxu0 %v242
    %327 = vmatpush.msra.mxu0 %v240
    %328 = vmatpush.msra.mxu0 %v238
    %329 = vmatpush.msra.mxu0 %v236
    %330 = vmatpush.msra.mxu0 %v234
    %331 = vmatpush.msra.mxu0 %v232
    %332 = vmatpush.msra.mxu0 %v230
    %333 = vmatmul.f32.gmra.mxu0 %v225
    %v334 = vpop.f32.mrf.mxu0
    %v335 = vadd.f32 %v295, %v334
    %336 = vdwg.mxu0
    %337 = vmatpush.msra.mxu0 %v261
    %338 = vmatpush.msra.mxu0 %v259
    %339 = vmatpush.msra.mxu0 %v257
    %340 = vmatpush.msra.mxu0 %v255
    %341 = vmatpush.msra.mxu0 %v253
    %342 = vmatpush.msra.mxu0 %v251
    %343 = vmatpush.msra.mxu0 %v249
    %344 = vmatpush.msra.mxu0 %v247
    %345 = vmatpush.msra.mxu0 %v245
    %346 = vmatpush.msra.mxu0 %v243
    %347 = vmatpush.msra.mxu0 %v241
    %348 = vmatpush.msra.mxu0 %v239
    %349 = vmatpush.msra.mxu0 %v237
    %350 = vmatpush.msra.mxu0 %v235
    %351 = vmatpush.msra.mxu0 %v233
    %352 = vmatpush.msra.mxu0 %v231
    %353 = vmatmul.f32.gmra.mxu0 %v225
    %v354 = vpop.f32.mrf.mxu0
    %v355 = vadd.f32 %v315, %v354
    %356 = vdwg.mxu0
    %v357 = vld [vmem:[%s9] sm:$0x3]
    %v359 = vperm.slane %v357, 0
    %v360 = vperm.slane %v357, 1
    %v363 = vadd.f32 %v335, %v359
    %v364 = vadd.f32 %v355, %v360
    %v365 = vmax.f32 %v363, 0.0
    %v366 = vmax.f32 %v364, 0.0
    %v367 = vld [vmem:[#allocation13] sm:$0xff]
    %v368 = vld [vmem:[#allocation13 + $0x8] sm:$0xff]
    %v369 = vld [vmem:[#allocation13 + $0x10] sm:$0xff]
    %v370 = vld [vmem:[#allocation13 + $0x18] sm:$0xff]
    %v371 = vld [vmem:[#allocation13 + $0x20] sm:$0xff]
    %v372 = vld [vmem:[#allocation13 + $0x28] sm:$0xff]
    %v373 = vld [vmem:[#allocation13 + $0x30] sm:$0xff]
    %v374 = vld [vmem:[#allocation13 + $0x38] sm:$0xff]
    %v375 = vld [vmem:[#allocation13 + $0x40] sm:$0xff]
    %v376 = vld [vmem:[#allocation13 + $0x48] sm:$0xff]
    %v377 = vld [vmem:[#allocation13 + $0x50] sm:$0xff]
    %v378 = vld [vmem:[#allocation13 + $0x58] sm:$0xff]
    %v379 = vld [vmem:[#allocation13 + $0x60] sm:$0xff]
    %v380 = vld [vmem:[#allocation13 + $0x68] sm:$0xff]
    %v381 = vld [vmem:[#allocation13 + $0x70] sm:$0xff]
    %v382 = vld [vmem:[#allocation13 + $0x78] sm:$0xff]
    %v383 = vld [vmem:[#allocation13 + $0x80] sm:$0xff]
    %v384 = vld [vmem:[#allocation13 + $0x88] sm:$0xff]
    %v385 = vld [vmem:[#allocation13 + $0x90] sm:$0xff]
    %v386 = vld [vmem:[#allocation13 + $0x98] sm:$0xff]
    %v387 = vld [vmem:[#allocation13 + $0xa0] sm:$0xff]
    %v388 = vld [vmem:[#allocation13 + $0xa8] sm:$0xff]
    %v389 = vld [vmem:[#allocation13 + $0xb0] sm:$0xff]
    %v390 = vld [vmem:[#allocation13 + $0xb8] sm:$0xff]
    %v391 = vld [vmem:[#allocation13 + $0xc0] sm:$0xff]
    %v392 = vld [vmem:[#allocation13 + $0xc8] sm:$0xff]
    %v393 = vld [vmem:[#allocation13 + $0xd0] sm:$0xff]
    %v394 = vld [vmem:[#allocation13 + $0xd8] sm:$0xff]
    %v395 = vld [vmem:[#allocation13 + $0xe0] sm:$0xff]
    %v396 = vld [vmem:[#allocation13 + $0xe8] sm:$0xff]
    %v397 = vld [vmem:[#allocation13 + $0xf0] sm:$0xff]
    %v398 = vld [vmem:[#allocation13 + $0xf8] sm:$0xff]
    %v399 = vld [vmem:[%s11] sm:$0x1]
    %v401 = vperm.slane %v399, 0
    %403 = vmatpush.msra.mxu0 %v382
    %404 = vmatpush.msra.mxu0 %v381
    %405 = vmatpush.msra.mxu0 %v380
    %406 = vmatpush.msra.mxu0 %v379
    %407 = vmatpush.msra.mxu0 %v378
    %408 = vmatpush.msra.mxu0 %v377
    %409 = vmatpush.msra.mxu0 %v376
    %410 = vmatpush.msra.mxu0 %v375
    %411 = vmatpush.msra.mxu0 %v374
    %412 = vmatpush.msra.mxu0 %v373
    %413 = vmatpush.msra.mxu0 %v372
    %414 = vmatpush.msra.mxu0 %v371
    %415 = vmatpush.msra.mxu0 %v370
    %416 = vmatpush.msra.mxu0 %v369
    %417 = vmatpush.msra.mxu0 %v368
    %418 = vmatpush.msra.mxu0 %v367
    %419 = vmatmul.f32.gmra.mxu0 %v365
    %v420 = vpop.f32.mrf.mxu0
    %v421 = vadd.f32 %v401, %v420
    %422 = vdwg.mxu0
    %423 = vmatpush.msra.mxu0 %v398
    %424 = vmatpush.msra.mxu0 %v397
    %425 = vmatpush.msra.mxu0 %v396
    %426 = vmatpush.msra.mxu0 %v395
    %427 = vmatpush.msra.mxu0 %v394
    %428 = vmatpush.msra.mxu0 %v393
    %429 = vmatpush.msra.mxu0 %v392
    %430 = vmatpush.msra.mxu0 %v391
    %431 = vmatpush.msra.mxu0 %v390
    %432 = vmatpush.msra.mxu0 %v389
    %433 = vmatpush.msra.mxu0 %v388
    %434 = vmatpush.msra.mxu0 %v387
    %435 = vmatpush.msra.mxu0 %v386
    %436 = vmatpush.msra.mxu0 %v385
    %437 = vmatpush.msra.mxu0 %v384
    %438 = vmatpush.msra.mxu0 %v383
    %439 = vmatmul.f32.gmra.mxu0 %v366
    %v440 = vpop.f32.mrf.mxu0
    %v441 = vadd.f32 %v421, %v440
    %442 = vdwg.mxu0
    %v443 = vsub.f32 %v441, %v228
    %v444 = vmul.f32 %v443, %v443
    %445 = vadd.xlane.f32.xlu0 %v444
    %v446 = vpop.xlane.xlu0 %445
    %v447 = vrcp.pop 128.0
    %v448 = vmul.f32 128.0, %v447
    %v449 = vsub.f32 1.0, %v448
    %v450 = vmul.f32 %v447, %v449
    %v451 = vadd.f32 %v447, %v450
    %vm452 = vweird.f32 %v447
    %v453 = vsel %vm452, %v447, %v451
    %v454 = vmul.f32 %v446, %v453
    %v456 = vlaneseq
    %v457 = vand.u32 %v456, 127
    %v458 = vperm.slane %v454, %v457
    %vm460 = vcmask 57344
    %461 = vst.msk [vmem:[#allocation14] sm:$0x1] %vm460, %v458
    // Predicated region
    $region78: #{tpu_custom_call.1} parent=1 // pred_check
      _
    $region79: #{tpu_custom_call.1} parent=1 // pred_check_branch
      %463 = sbr.rel (0) target = $region81
    $region80: #{tpu_custom_call.1} parent=1 // pred_region
      %465 = vsyncadd [#allocation4], 0
      %s467 = sshll.u32 [#allocation14], 4
      %s468 = int_to_ptr.vmem [resolvable:$true] %s467
      %s469 = sshll.u32 %s12, 4
      %s470 = int_to_ptr.hbm [resolvable:$true] %s469
      %472 = dma.vmem_to_hbm [thread:$0]  %s468, 16, %s470, [#allocation4]
    $region81: #{tpu_custom_call.1} parent=1 // pred_fallthru
      _
    // Predicated region
    $region82: #{tpu_custom_call.1} parent=1 // pred_check
      _
    $region83: #{tpu_custom_call.1} parent=1 // pred_check_branch
      %474 = sbr.rel (0) target = $region85
    $region84: #{tpu_custom_call.1} parent=1 // pred_region
      %476 = dma.done [#allocation4], 16
    $region85: #{tpu_custom_call.1} parent=1 // pred_fallthru
      _
    %477 = vsyncpa [#allocation3], 1
    %478 = vsyncpa [#allocation6], 1
    %479 = vsyncpa [#allocation9], 1
    %480 = vsyncpa [#allocation12], 1
    %481 = vsyncpa [#allocation4], 1

</llo_original>
